<compile_context>
chip_gen: v7x
topology: tpu7x:2x2x1
jax: 0.10.0
libtpu: 0.0.40
codegen_flags: <defaults>
</compile_context>

<pallas_src>
import functools

import jax
import jax.numpy as jnp
from jax.experimental import pallas as pl
from jax.experimental.pallas import tpu as pltpu

LANE = 128


def _ceil_to(v, m):
    return (v + m - 1) // m * m


# ----------------------------------------------------------------------------
# Fused Pallas kernel: all SAGEConv layers + ReLUs in one invocation
# ----------------------------------------------------------------------------
def fused_sage_kernel(a_ref, x_ref, w_ref, o_ref, h_ref, *, num_layers):
    """Single-invocation fused SAGE forward.

    a_ref : [Np, Np]        bf16  row-normalized mean-aggregation operator
    x_ref : [Np, Fp]        bf16  zero-padded node features (Fp = 128-multiple)
    w_ref : [L, 2*Fp, Fp]   bf16  per-layer concat([W_l ; W_r]) weights (padded)
    o_ref : [Np, Fp]        f32   final-layer output (padded)
    h_ref : [Np, Fp]        bf16  VMEM scratch: current activations
    """
    a = a_ref[...]                      # stays resident in VMEM across layers
    h_ref[...] = x_ref[...]
    for layer in range(num_layers):     # static unroll, L is small
        h = h_ref[...]
        # Neighbor mean aggregation: [Np, Np] @ [Np, Fp] -> f32 accumulate.
        agg = jnp.dot(a, h, preferred_element_type=jnp.float32)
        # One MXU pass for both the neighbor and root transforms:
        #   [agg | h] @ [W_l ; W_r]   (K = 2*Fp instead of two tiny-K matmuls)
        cat = jnp.concatenate([agg.astype(jnp.bfloat16), h], axis=-1)
        out = jnp.dot(cat, w_ref[layer], preferred_element_type=jnp.float32)
        if layer < num_layers - 1:
            # ReLU in f32, then store back to bf16 scratch (padding stays zero).
            h_ref[...] = jnp.maximum(out, 0.0).astype(jnp.bfloat16)
        else:
            o_ref[...] = out.astype(o_ref.dtype)


# ----------------------------------------------------------------------------
# Wrapper: build padded/bf16 operands, launch the single fused kernel
# ----------------------------------------------------------------------------
def sage_forward(x, edge_index, params):
    n, f_in = x.shape
    num_layers = len(params)
    hidden = params[-1][0].shape[1]

    n_pad = _ceil_to(max(n, 16), 16)                       # sublane-friendly rows
    f_pad = _ceil_to(max(f_in, hidden, LANE), LANE)        # lane-dense features

    # Mean-aggregation operator (built once per forward, reused by all layers).
    # PyG convention: edge_index[0] = source j, edge_index[1] = target i.
    src, dst = edge_index[0], edge_index[1]
    adj = jnp.zeros((n_pad, n_pad), jnp.float32).at[dst, src].add(1.0)
    deg = adj.sum(axis=1, keepdims=True)
    a_mean = (adj / jnp.maximum(deg, 1.0)).astype(jnp.bfloat16)

    # Zero-pad node features to [Np, Fp] (padded lanes/rows are exactly zero).
    x_p = jnp.zeros((n_pad, f_pad), jnp.bfloat16).at[:n, :f_in].set(
        x.astype(jnp.bfloat16))

    # Stack per-layer concat weights into one [L, 2*Fp, Fp] bf16 tensor.
    w_stack = []
    for (w_l, w_r) in params:
        fi, fo = w_l.shape
        wl_p = jnp.zeros((f_pad, f_pad), jnp.float32).at[:fi, :fo].set(w_l)
        wr_p = jnp.zeros((f_pad, f_pad), jnp.float32).at[:fi, :fo].set(w_r)
        w_stack.append(jnp.concatenate([wl_p, wr_p], axis=0))
    w = jnp.stack(w_stack, axis=0).astype(jnp.bfloat16)

    kern = functools.partial(fused_sage_kernel, num_layers=num_layers)
    # Small problem: everything fits comfortably in VMEM, so a single
    # invocation (no grid) with full-array VMEM residency is the right tiling.
    out_p = pl.pallas_call(
        kern,
        out_shape=jax.ShapeDtypeStruct((n_pad, f_pad), jnp.float32),
        in_specs=[pl.BlockSpec(memory_space=pltpu.MemorySpace.VMEM)] * 3,
        out_specs=pl.BlockSpec(memory_space=pltpu.MemorySpace.VMEM),
        scratch_shapes=[pltpu.VMEM((n_pad, f_pad), jnp.bfloat16)],
        compiler_params=pltpu.CompilerParams(vmem_limit_bytes=64 << 20),
    )(a_mean, x_p, w)

    return out_p[:n, :hidden]


# ----------------------------------------------------------------------------
# Parameter init (deterministic glorot-uniform, matching SAGEConv shapes)
# ----------------------------------------------------------------------------
def init_sage_params(key, in_channels, hidden_channels, num_layers):
    dims = []
    if num_layers == 1:
        dims.append((in_channels, hidden_channels))
    else:
        dims.append((in_channels, hidden_channels))
        for _ in range(num_layers - 2):
            dims.append((hidden_channels, hidden_channels))
        dims.append((hidden_channels, hidden_channels))  # module maps hidden->hidden last
    params = []
    for (fin, fout) in dims:
        key, kl, kr = jax.random.split(key, 3)
        bound = (6.0 / (fin + fout)) ** 0.5
        w_l = jax.random.uniform(kl, (fin, fout), jnp.float32, -bound, bound)
        w_r = jax.random.uniform(kr, (fin, fout), jnp.float32, -bound, bound)
        params.append((w_l, w_r))
    return params


if __name__ == "__main__":
    key = jax.random.PRNGKey(0)

    num_nodes = 16
    in_channels = 16
    hidden_channels = 32
    out_channels = 32          # unused by the reference module's layer dims
    num_layers = 3
    dropout = 0.5              # eval mode -> no-op
    num_edges = 40

    k_x, k_src, k_dst, k_p = jax.random.split(key, 4)
    x = jax.random.normal(k_x, (num_nodes, in_channels), jnp.float32)
    edge_index = jnp.stack([
        jax.random.randint(k_src, (num_edges,), 0, num_nodes, dtype=jnp.int32),
        jax.random.randint(k_dst, (num_edges,), 0, num_nodes, dtype=jnp.int32),
    ], axis=0)

    params = init_sage_params(k_p, in_channels, hidden_channels, num_layers)

    out = sage_forward(x, edge_index, params)
    jax.block_until_ready(out)
    assert out.shape == (num_nodes, hidden_channels)
    assert bool(jnp.all(jnp.isfinite(out)))
    print("KERNEL_OK")
</pallas_src>

<mosaic_0001>
module attributes {stable_mosaic.version = 11 : i64} {
  func.func @fused_sage_kernel(%arg0: memref<16x16xbf16, #tpu.memory_space<vmem>>, %arg1: memref<16x128xbf16, #tpu.memory_space<vmem>>, %arg2: memref<3x256x128xbf16, #tpu.memory_space<vmem>>, %arg3: memref<16x128xf32, #tpu.memory_space<vmem>>, %arg4: memref<16x128xbf16, #tpu.memory_space<vmem>>) attributes {dimension_semantics = [], scalar_prefetch = 0 : i64, scratch_operands = 1 : i64, tpu.core_type = #tpu.core_type<tc>} {
    %c0 = arith.constant 0 : index
    %c0_0 = arith.constant 0 : index
    %0 = vector.load %arg0[%c0, %c0_0] : memref<16x16xbf16, #tpu.memory_space<vmem>>, vector<16x16xbf16>
    %c0_1 = arith.constant 0 : index
    %c0_2 = arith.constant 0 : index
    %1 = vector.load %arg1[%c0_1, %c0_2] : memref<16x128xbf16, #tpu.memory_space<vmem>>, vector<16x128xbf16>
    %c0_3 = arith.constant 0 : index
    %c0_4 = arith.constant 0 : index
    %2 = vector.load %arg4[%c0_3, %c0_4] : memref<16x128xbf16, #tpu.memory_space<vmem>>, vector<16x128xbf16>
    tpu.vector_store %arg4[%c0_3, %c0_4], %1 {strides = array<i32>} : memref<16x128xbf16, #tpu.memory_space<vmem>>, vector<16x128xbf16>,
    %c0_5 = arith.constant 0 : index
    %c0_6 = arith.constant 0 : index
    %3 = vector.load %arg4[%c0_5, %c0_6] : memref<16x128xbf16, #tpu.memory_space<vmem>>, vector<16x128xbf16>
    %cst = arith.constant dense<0.000000e+00> : vector<16x128xf32>
    %4 = tpu.matmul %0, %3, %cst {dimension_numbers = #tpu.dot_dimension_numbers<[1], [0], [0], [1], [0, 0, 1, 1], [], []>} : vector<16x16xbf16>, vector<16x128xbf16>, vector<16x128xf32> -> vector<16x128xf32>
    %5 = arith.truncf %4 : vector<16x128xf32> to vector<16x128xbf16>
    %6 = tpu.concatenate %5, %3 in 1 : vector<16x128xbf16>, vector<16x128xbf16> -> vector<16x256xbf16>
    %c0_7 = arith.constant 0 : index
    %c0_8 = arith.constant 0 : index
    %c0_9 = arith.constant 0 : index
    %7 = vector.load %arg2[%c0_7, %c0_8, %c0_9] : memref<3x256x128xbf16, #tpu.memory_space<vmem>>, vector<1x256x128xbf16>
    %8 = vector.shape_cast %7 : vector<1x256x128xbf16> to vector<256x128xbf16>
    %cst_10 = arith.constant dense<0.000000e+00> : vector<16x128xf32>
    %9 = tpu.matmul %6, %8, %cst_10 {dimension_numbers = #tpu.dot_dimension_numbers<[1], [0], [0], [1], [0, 0, 1, 1], [], []>} : vector<16x256xbf16>, vector<256x128xbf16>, vector<16x128xf32> -> vector<16x128xf32>
    %cst_11 = arith.constant 0.000000e+00 : f32
    %10 = vector.broadcast %cst_11 : f32 to vector<16x128xf32>
    %11 = arith.maximumf %9, %10 : vector<16x128xf32>
    %12 = arith.truncf %11 : vector<16x128xf32> to vector<16x128xbf16>
    %c0_12 = arith.constant 0 : index
    %c0_13 = arith.constant 0 : index
    %13 = vector.load %arg4[%c0_12, %c0_13] : memref<16x128xbf16, #tpu.memory_space<vmem>>, vector<16x128xbf16>
    tpu.vector_store %arg4[%c0_12, %c0_13], %12 {strides = array<i32>} : memref<16x128xbf16, #tpu.memory_space<vmem>>, vector<16x128xbf16>,
    %c0_14 = arith.constant 0 : index
    %c0_15 = arith.constant 0 : index
    %14 = vector.load %arg4[%c0_14, %c0_15] : memref<16x128xbf16, #tpu.memory_space<vmem>>, vector<16x128xbf16>
    %cst_16 = arith.constant dense<0.000000e+00> : vector<16x128xf32>
    %15 = tpu.matmul %0, %14, %cst_16 {dimension_numbers = #tpu.dot_dimension_numbers<[1], [0], [0], [1], [0, 0, 1, 1], [], []>} : vector<16x16xbf16>, vector<16x128xbf16>, vector<16x128xf32> -> vector<16x128xf32>
    %16 = arith.truncf %15 : vector<16x128xf32> to vector<16x128xbf16>
    %17 = tpu.concatenate %16, %14 in 1 : vector<16x128xbf16>, vector<16x128xbf16> -> vector<16x256xbf16>
    %c1 = arith.constant 1 : index
    %c0_17 = arith.constant 0 : index
    %c0_18 = arith.constant 0 : index
    %18 = vector.load %arg2[%c1, %c0_17, %c0_18] : memref<3x256x128xbf16, #tpu.memory_space<vmem>>, vector<1x256x128xbf16>
    %19 = vector.shape_cast %18 : vector<1x256x128xbf16> to vector<256x128xbf16>
    %cst_19 = arith.constant dense<0.000000e+00> : vector<16x128xf32>
    %20 = tpu.matmul %17, %19, %cst_19 {dimension_numbers = #tpu.dot_dimension_numbers<[1], [0], [0], [1], [0, 0, 1, 1], [], []>} : vector<16x256xbf16>, vector<256x128xbf16>, vector<16x128xf32> -> vector<16x128xf32>
    %cst_20 = arith.constant 0.000000e+00 : f32
    %21 = vector.broadcast %cst_20 : f32 to vector<16x128xf32>
    %22 = arith.maximumf %20, %21 : vector<16x128xf32>
    %23 = arith.truncf %22 : vector<16x128xf32> to vector<16x128xbf16>
    %c0_21 = arith.constant 0 : index
    %c0_22 = arith.constant 0 : index
    %24 = vector.load %arg4[%c0_21, %c0_22] : memref<16x128xbf16, #tpu.memory_space<vmem>>, vector<16x128xbf16>
    tpu.vector_store %arg4[%c0_21, %c0_22], %23 {strides = array<i32>} : memref<16x128xbf16, #tpu.memory_space<vmem>>, vector<16x128xbf16>,
    %c0_23 = arith.constant 0 : index
    %c0_24 = arith.constant 0 : index
    %25 = vector.load %arg4[%c0_23, %c0_24] : memref<16x128xbf16, #tpu.memory_space<vmem>>, vector<16x128xbf16>
    %cst_25 = arith.constant dense<0.000000e+00> : vector<16x128xf32>
    %26 = tpu.matmul %0, %25, %cst_25 {dimension_numbers = #tpu.dot_dimension_numbers<[1], [0], [0], [1], [0, 0, 1, 1], [], []>} : vector<16x16xbf16>, vector<16x128xbf16>, vector<16x128xf32> -> vector<16x128xf32>
    %27 = arith.truncf %26 : vector<16x128xf32> to vector<16x128xbf16>
    %28 = tpu.concatenate %27, %25 in 1 : vector<16x128xbf16>, vector<16x128xbf16> -> vector<16x256xbf16>
    %c2 = arith.constant 2 : index
    %c0_26 = arith.constant 0 : index
    %c0_27 = arith.constant 0 : index
    %29 = vector.load %arg2[%c2, %c0_26, %c0_27] : memref<3x256x128xbf16, #tpu.memory_space<vmem>>, vector<1x256x128xbf16>
    %30 = vector.shape_cast %29 : vector<1x256x128xbf16> to vector<256x128xbf16>
    %cst_28 = arith.constant dense<0.000000e+00> : vector<16x128xf32>
    %31 = tpu.matmul %28, %30, %cst_28 {dimension_numbers = #tpu.dot_dimension_numbers<[1], [0], [0], [1], [0, 0, 1, 1], [], []>} : vector<16x256xbf16>, vector<256x128xbf16>, vector<16x128xf32> -> vector<16x128xf32>
    %c0_29 = arith.constant 0 : index
    %c0_30 = arith.constant 0 : index
    %32 = vector.load %arg3[%c0_29, %c0_30] : memref<16x128xf32, #tpu.memory_space<vmem>>, vector<16x128xf32>
    tpu.vector_store %arg3[%c0_29, %c0_30], %31 {strides = array<i32>} : memref<16x128xf32, #tpu.memory_space<vmem>>, vector<16x128xf32>,
    return
  }
}

</mosaic_0001>

<llo_original>
// kernel: tpu_custom_call.1
$region0: #{tpu_custom_call.1}
  #allocation0 [shape = 'u32[]', space=smem, size = 0x4, offset = 0x4, fixed_abs, tag = 'smem constant byte address 0x4 - core index']
  #allocation1 [shape = 'u32[144,128]{1,0:T(1,128)}', space=vmem, size = 0x12000, scoped, tag = 'internal scratch']
  #allocation2 [shape = 'bf16[16,128]{1,0:T(16,128)(2,1)}', space=vmem, size = 0x1000, scoped, tag = 'scratch operand']
  %s0 = inlined_call_operand.hbm [shape: bf16[16,16], index: 0, kind: input, shape index: {}]
  %s1 = inlined_call_operand.hbm [shape: bf16[16,128], index: 1, kind: input, shape index: {}]
  %s2 = inlined_call_operand.hbm [shape: bf16[3,256,128], index: 2, kind: input, shape index: {}]
  %s3 = inlined_call_operand.hbm [shape: f32[16,128], index: 3, kind: output, shape index: {}]
  %s4 = sld [smem:[#allocation0]]
  $region34: #{tpu_custom_call.1} parent=0
    _
  %s6 = ssub.s32 1, %s4
  %s7 = scalar_select 0, %s6, %s4
  $region1: #{tpu_custom_call.1} parent=0
    #allocation3 [shape = 'u8[4096]{0}', space=vmem, size = 0x1000, scoped, tag = 'input window, operand 0, single buffered']
    #allocation4 [shape = 's32[1]{0}', space=sflag, size = 0x4, scoped, tag = 'scoped memory for tpu_custom_call.1']
    #allocation5 [shape = 's32[1]{0}', space=sflag, size = 0x4, scoped, tag = 'scoped memory for tpu_custom_call.1']
    #allocation6 [shape = 'u8[4096]{0}', space=vmem, size = 0x1000, scoped, tag = 'input window, operand 1, single buffered']
    #allocation7 [shape = 's32[1]{0}', space=sflag, size = 0x4, scoped, tag = 'scoped memory for tpu_custom_call.1']
    #allocation8 [shape = 'u8[196608]{0}', space=vmem, size = 0x30000, scoped, tag = 'input window, operand 2, single buffered']
    #allocation9 [shape = 'u8[8192]{0}', space=vmem, size = 0x2000, scoped, tag = 'output window, operand 0, single buffered']
    %8 = vsyncpa [#allocation4], 0
    %9 = vsyncpa [#allocation7], 0
    %10 = vsyncpa [#allocation5], 0
    // Predicated region
    $region2: #{tpu_custom_call.1} parent=1 // pred_check
      _
    $region3: #{tpu_custom_call.1} parent=1 // pred_check_branch
      %12 = sbr.rel (0) target = $region5
    $region4: #{tpu_custom_call.1} parent=1 // pred_region
      %s14 = ssub.s32 128, 128
      %15 = vsyncadd [#allocation4], %s14
      %s16 = sshll.u32 [#allocation3], 4
      %s17 = int_to_ptr.vmem [resolvable:$true] %s16
      %22 = dma.hbm_to_vmem [thread:$0]  %s0, 128, %s17, [#allocation4], 64, 64, 4
    $region5: #{tpu_custom_call.1} parent=1 // pred_fallthru
      _
    // Predicated region
    $region6: #{tpu_custom_call.1} parent=1 // pred_check
      _
    $region7: #{tpu_custom_call.1} parent=1 // pred_check_branch
      %24 = sbr.rel (0) target = $region9
    $region8: #{tpu_custom_call.1} parent=1 // pred_region
      %s26 = ssub.s32 128, 128
      %27 = vsyncadd [#allocation7], %s26
      %s28 = sshll.u32 [#allocation6], 4
      %s29 = int_to_ptr.vmem [resolvable:$true] %s28
      %34 = dma.hbm_to_vmem [thread:$0]  %s1, 128, %s29, [#allocation7], 64, 64, 4
    $region9: #{tpu_custom_call.1} parent=1 // pred_fallthru
      _
    // Predicated region
    $region10: #{tpu_custom_call.1} parent=1 // pred_check
      _
    $region11: #{tpu_custom_call.1} parent=1 // pred_check_branch
      %36 = sbr.rel (0) target = $region13
    $region12: #{tpu_custom_call.1} parent=1 // pred_region
      %s38 = ssub.s32 6144, 6144
      %39 = vsyncadd [#allocation7], %s38
      %s40 = sshll.u32 [#allocation8], 4
      %s41 = int_to_ptr.vmem [resolvable:$true] %s40
      %46 = dma.hbm_to_vmem [thread:$0]  %s2, 6144, %s41, [#allocation7], 64, 64, 4
    $region13: #{tpu_custom_call.1} parent=1 // pred_fallthru
      _
    // Predicated region
    $region14: #{tpu_custom_call.1} parent=1 // pred_check
      _
    $region15: #{tpu_custom_call.1} parent=1 // pred_check_branch
      %48 = sbr.rel (0) target = $region17
    $region16: #{tpu_custom_call.1} parent=1 // pred_region
      %49 = dma.done [#allocation4], 128
    $region17: #{tpu_custom_call.1} parent=1 // pred_fallthru
      _
    // Predicated region
    $region18: #{tpu_custom_call.1} parent=1 // pred_check
      _
    $region19: #{tpu_custom_call.1} parent=1 // pred_check_branch
      %51 = sbr.rel (0) target = $region21
    $region20: #{tpu_custom_call.1} parent=1 // pred_region
      %52 = dma.done [#allocation7], 128
    $region21: #{tpu_custom_call.1} parent=1 // pred_fallthru
      _
    // Predicated region
    $region22: #{tpu_custom_call.1} parent=1 // pred_check
      _
    $region23: #{tpu_custom_call.1} parent=1 // pred_check_branch
      %54 = sbr.rel (0) target = $region25
    $region24: #{tpu_custom_call.1} parent=1 // pred_region
      %55 = dma.done [#allocation7], 6144
    $region25: #{tpu_custom_call.1} parent=1 // pred_fallthru
      _
    %v57 = vld [vmem:[#allocation3] sm:$0xf]
    %v58 = vld [vmem:[#allocation3 + $0x4] sm:$0xf]
    %v59 = vld [vmem:[#allocation6] sm:$0xf]
    %v60 = vld [vmem:[#allocation6 + $0x4] sm:$0xf]
    %v63 = vunpack.c.l.b16 %v59
    %v64 = vunpack.c.l.b16 %v60
    %v65 = vpack.c.b16 %v64, %v63
    %67 = vst [vmem:[#allocation2] sm:$0xff] %v65
    %v68 = vld [vmem:[#allocation2] sm:$0xff]
    %v71 = vunpack.c.l.b16 %v57
    %v72 = vunpack.c.l.b16 %v58
    %v73 = vpack.c.b16 %v72, %v71
    %vm74 = vcmask 130048
    %v76 = vsel %vm74, %v73, 0
    %78 = vmatprep.subr.bf16.mxu0 0
    %79 = vmatpush1.bf16.msra.mxu0 %v68
    %80 = vmatprep.subr.bf16.mxu0 0
    %81 = vmatpush1.bf16.msra.mxu0 0
    %82 = vmatprep.subr.bf16.mxu0 0
    %83 = vmatpush1.bf16.msra.mxu0 0
    %84 = vmatprep.subr.bf16.mxu0 0
    %85 = vmatpush1.bf16.msra.mxu0 0
    %86 = vmatprep.subr.bf16.mxu0 0
    %87 = vmatpush1.bf16.msra.mxu0 0
    %88 = vmatprep.subr.bf16.mxu0 0
    %89 = vmatpush1.bf16.msra.mxu0 0
    %90 = vmatprep.subr.bf16.mxu0 0
    %91 = vmatpush1.bf16.msra.mxu0 0
    %92 = vmatprep.subr.bf16.mxu0 0
    %93 = vmatpush1.bf16.msra.mxu0 0
    %94 = vmatprep.subr.bf16.mxu0 0
    %95 = vmatpush1.bf16.msra.mxu0 0
    %96 = vmatprep.subr.bf16.mxu0 0
    %97 = vmatpush1.bf16.msra.mxu0 0
    %98 = vmatprep.subr.bf16.mxu0 0
    %99 = vmatpush1.bf16.msra.mxu0 0
    %100 = vmatprep.subr.bf16.mxu0 0
    %101 = vmatpush1.bf16.msra.mxu0 0
    %102 = vmatprep.subr.bf16.mxu0 0
    %103 = vmatpush1.bf16.msra.mxu0 0
    %104 = vmatprep.subr.bf16.mxu0 0
    %105 = vmatpush1.bf16.msra.mxu0 0
    %106 = vmatprep.subr.bf16.mxu0 0
    %107 = vmatpush1.bf16.msra.mxu0 0
    %108 = vmatprep.subr.bf16.mxu0 0
    %109 = vmatpush1.bf16.msra.mxu0 0
    %110 = vmatprep.mubr.bf16.mxu0 0
    %111 = vmatmul.mubr.bf16.gmra.mrb[0].mxu0 %v76
    %v112 = vpop.f32.mrb[0].mxu0
    %v113 = vadd.f32 0.0, %v112
    %v114 = vpop.f32.mrb[0].mxu0
    %v115 = vpop.f32.mrb[0].mxu0
    %v116 = vadd.f32 0.0, %v115
    %v117 = vpop.f32.mrb[0].mxu0
    %118 = vdwg.mxu0
    %v119 = vpack.c.bf16 %v116, %v113
    %v120 = vld [vmem:[#allocation8] sm:$0xf]
    %v121 = vld [vmem:[#allocation8 + $0x4] sm:$0xf]
    %v122 = vld [vmem:[#allocation8 + $0x8] sm:$0xf]
    %v123 = vld [vmem:[#allocation8 + $0xc] sm:$0xf]
    %v124 = vld [vmem:[#allocation8 + $0x10] sm:$0xf]
    %v125 = vld [vmem:[#allocation8 + $0x14] sm:$0xf]
    %v126 = vld [vmem:[#allocation8 + $0x18] sm:$0xf]
    %v127 = vld [vmem:[#allocation8 + $0x1c] sm:$0xf]
    %v128 = vld [vmem:[#allocation8 + $0x20] sm:$0xf]
    %v129 = vld [vmem:[#allocation8 + $0x24] sm:$0xf]
    %v130 = vld [vmem:[#allocation8 + $0x28] sm:$0xf]
    %v131 = vld [vmem:[#allocation8 + $0x2c] sm:$0xf]
    %v132 = vld [vmem:[#allocation8 + $0x30] sm:$0xf]
    %v133 = vld [vmem:[#allocation8 + $0x34] sm:$0xf]
    %v134 = vld [vmem:[#allocation8 + $0x38] sm:$0xf]
    %v135 = vld [vmem:[#allocation8 + $0x3c] sm:$0xf]
    %v136 = vld [vmem:[#allocation8 + $0x40] sm:$0xf]
    %v137 = vld [vmem:[#allocation8 + $0x44] sm:$0xf]
    %v138 = vld [vmem:[#allocation8 + $0x48] sm:$0xf]
    %v139 = vld [vmem:[#allocation8 + $0x4c] sm:$0xf]
    %v140 = vld [vmem:[#allocation8 + $0x50] sm:$0xf]
    %v141 = vld [vmem:[#allocation8 + $0x54] sm:$0xf]
    %v142 = vld [vmem:[#allocation8 + $0x58] sm:$0xf]
    %v143 = vld [vmem:[#allocation8 + $0x5c] sm:$0xf]
    %v144 = vld [vmem:[#allocation8 + $0x60] sm:$0xf]
    %v145 = vld [vmem:[#allocation8 + $0x64] sm:$0xf]
    %v146 = vld [vmem:[#allocation8 + $0x68] sm:$0xf]
    %v147 = vld [vmem:[#allocation8 + $0x6c] sm:$0xf]
    %v148 = vld [vmem:[#allocation8 + $0x70] sm:$0xf]
    %v149 = vld [vmem:[#allocation8 + $0x74] sm:$0xf]
    %v150 = vld [vmem:[#allocation8 + $0x78] sm:$0xf]
    %v151 = vld [vmem:[#allocation8 + $0x7c] sm:$0xf]
    %v184 = vunpack.c.l.b16 %v120
    %v185 = vunpack.c.l.b16 %v121
    %v186 = vunpack.c.l.b16 %v122
    %v187 = vunpack.c.l.b16 %v123
    %v188 = vunpack.c.l.b16 %v124
    %v189 = vunpack.c.l.b16 %v125
    %v190 = vunpack.c.l.b16 %v126
    %v191 = vunpack.c.l.b16 %v127
    %v192 = vunpack.c.l.b16 %v128
    %v193 = vunpack.c.l.b16 %v129
    %v194 = vunpack.c.l.b16 %v130
    %v195 = vunpack.c.l.b16 %v131
    %v196 = vunpack.c.l.b16 %v132
    %v197 = vunpack.c.l.b16 %v133
    %v198 = vunpack.c.l.b16 %v134
    %v199 = vunpack.c.l.b16 %v135
    %v200 = vunpack.c.l.b16 %v136
    %v201 = vunpack.c.l.b16 %v137
    %v202 = vunpack.c.l.b16 %v138
    %v203 = vunpack.c.l.b16 %v139
    %v204 = vunpack.c.l.b16 %v140
    %v205 = vunpack.c.l.b16 %v141
    %v206 = vunpack.c.l.b16 %v142
    %v207 = vunpack.c.l.b16 %v143
    %v208 = vunpack.c.l.b16 %v144
    %v209 = vunpack.c.l.b16 %v145
    %v210 = vunpack.c.l.b16 %v146
    %v211 = vunpack.c.l.b16 %v147
    %v212 = vunpack.c.l.b16 %v148
    %v213 = vunpack.c.l.b16 %v149
    %v214 = vunpack.c.l.b16 %v150
    %v215 = vunpack.c.l.b16 %v151
    %v216 = vpack.c.b16 %v185, %v184
    %v217 = vpack.c.b16 %v187, %v186
    %v218 = vpack.c.b16 %v189, %v188
    %v219 = vpack.c.b16 %v191, %v190
    %v220 = vpack.c.b16 %v193, %v192
    %v221 = vpack.c.b16 %v195, %v194
    %v222 = vpack.c.b16 %v197, %v196
    %v223 = vpack.c.b16 %v199, %v198
    %v224 = vpack.c.b16 %v201, %v200
    %v225 = vpack.c.b16 %v203, %v202
    %v226 = vpack.c.b16 %v205, %v204
    %v227 = vpack.c.b16 %v207, %v206
    %v228 = vpack.c.b16 %v209, %v208
    %v229 = vpack.c.b16 %v211, %v210
    %v230 = vpack.c.b16 %v213, %v212
    %v231 = vpack.c.b16 %v215, %v214
    %248 = vmatprep.subr.bf16.mxu0 0
    %249 = vmatpush1.bf16.msra.mxu0 %v216
    %250 = vmatprep.subr.bf16.mxu0 0
    %251 = vmatpush1.bf16.msra.mxu0 %v217
    %252 = vmatprep.subr.bf16.mxu0 0
    %253 = vmatpush1.bf16.msra.mxu0 %v218
    %254 = vmatprep.subr.bf16.mxu0 0
    %255 = vmatpush1.bf16.msra.mxu0 %v219
    %256 = vmatprep.subr.bf16.mxu0 0
    %257 = vmatpush1.bf16.msra.mxu0 %v220
    %258 = vmatprep.subr.bf16.mxu0 0
    %259 = vmatpush1.bf16.msra.mxu0 %v221
    %260 = vmatprep.subr.bf16.mxu0 0
    %261 = vmatpush1.bf16.msra.mxu0 %v222
    %262 = vmatprep.subr.bf16.mxu0 0
    %263 = vmatpush1.bf16.msra.mxu0 %v223
    %264 = vmatprep.subr.bf16.mxu0 0
    %265 = vmatpush1.bf16.msra.mxu0 %v224
    %266 = vmatprep.subr.bf16.mxu0 0
    %267 = vmatpush1.bf16.msra.mxu0 %v225
    %268 = vmatprep.subr.bf16.mxu0 0
    %269 = vmatpush1.bf16.msra.mxu0 %v226
    %270 = vmatprep.subr.bf16.mxu0 0
    %271 = vmatpush1.bf16.msra.mxu0 %v227
    %272 = vmatprep.subr.bf16.mxu0 0
    %273 = vmatpush1.bf16.msra.mxu0 %v228
    %274 = vmatprep.subr.bf16.mxu0 0
    %275 = vmatpush1.bf16.msra.mxu0 %v229
    %276 = vmatprep.subr.bf16.mxu0 0
    %277 = vmatpush1.bf16.msra.mxu0 %v230
    %278 = vmatprep.subr.bf16.mxu0 0
    %279 = vmatpush1.bf16.msra.mxu0 %v231
    %280 = vmatprep.mubr.bf16.mxu0 %v68
    %281 = vmatmul.mubr.bf16.gmra.mrb[0].mxu0 %v119
    %v282 = vpop.f32.mrb[0].mxu0
    %v283 = vadd.f32 0.0, %v282
    %v284 = vpop.f32.mrb[0].mxu0
    %v285 = vpop.f32.mrb[0].mxu0
    %v286 = vadd.f32 0.0, %v285
    %v287 = vpop.f32.mrb[0].mxu0
    %288 = vdwg.mxu0
    %v289 = vmax.f32 %v283, 0.0
    %v290 = vmax.f32 %v286, 0.0
    %v291 = vpack.c.bf16 %v290, %v289
    %292 = vst [vmem:[#allocation2] sm:$0xff] %v291
    %v293 = vld [vmem:[#allocation2] sm:$0xff]
    %294 = vmatprep.subr.bf16.mxu0 0
    %295 = vmatpush1.bf16.msra.mxu0 %v293
    %296 = vmatprep.subr.bf16.mxu0 0
    %297 = vmatpush1.bf16.msra.mxu0 0
    %298 = vmatprep.subr.bf16.mxu0 0
    %299 = vmatpush1.bf16.msra.mxu0 0
    %300 = vmatprep.subr.bf16.mxu0 0
    %301 = vmatpush1.bf16.msra.mxu0 0
    %302 = vmatprep.subr.bf16.mxu0 0
    %303 = vmatpush1.bf16.msra.mxu0 0
    %304 = vmatprep.subr.bf16.mxu0 0
    %305 = vmatpush1.bf16.msra.mxu0 0
    %306 = vmatprep.subr.bf16.mxu0 0
    %307 = vmatpush1.bf16.msra.mxu0 0
    %308 = vmatprep.subr.bf16.mxu0 0
    %309 = vmatpush1.bf16.msra.mxu0 0
    %310 = vmatprep.subr.bf16.mxu0 0
    %311 = vmatpush1.bf16.msra.mxu0 0
    %312 = vmatprep.subr.bf16.mxu0 0
    %313 = vmatpush1.bf16.msra.mxu0 0
    %314 = vmatprep.subr.bf16.mxu0 0
    %315 = vmatpush1.bf16.msra.mxu0 0
    %316 = vmatprep.subr.bf16.mxu0 0
    %317 = vmatpush1.bf16.msra.mxu0 0
    %318 = vmatprep.subr.bf16.mxu0 0
    %319 = vmatpush1.bf16.msra.mxu0 0
    %320 = vmatprep.subr.bf16.mxu0 0
    %321 = vmatpush1.bf16.msra.mxu0 0
    %322 = vmatprep.subr.bf16.mxu0 0
    %323 = vmatpush1.bf16.msra.mxu0 0
    %324 = vmatprep.subr.bf16.mxu0 0
    %325 = vmatpush1.bf16.msra.mxu0 0
    %326 = vmatprep.mubr.bf16.mxu0 0
    %327 = vmatmul.mubr.bf16.gmra.mrb[0].mxu0 %v76
    %v328 = vpop.f32.mrb[0].mxu0
    %v329 = vadd.f32 0.0, %v328
    %v330 = vpop.f32.mrb[0].mxu0
    %v331 = vpop.f32.mrb[0].mxu0
    %v332 = vadd.f32 0.0, %v331
    %v333 = vpop.f32.mrb[0].mxu0
    %334 = vdwg.mxu0
    %v335 = vpack.c.bf16 %v332, %v329
    %s336 = scalar_lea.vmem [#allocation8], 128
    %v337 = vld [vmem:[%s336] sm:$0xf]
    %v338 = vld [vmem:[%s336 + $0x4] sm:$0xf]
    %v339 = vld [vmem:[%s336 + $0x8] sm:$0xf]
    %v340 = vld [vmem:[%s336 + $0xc] sm:$0xf]
    %v341 = vld [vmem:[%s336 + $0x10] sm:$0xf]
    %v342 = vld [vmem:[%s336 + $0x14] sm:$0xf]
    %v343 = vld [vmem:[%s336 + $0x18] sm:$0xf]
    %v344 = vld [vmem:[%s336 + $0x1c] sm:$0xf]
    %v345 = vld [vmem:[%s336 + $0x20] sm:$0xf]
    %v346 = vld [vmem:[%s336 + $0x24] sm:$0xf]
    %v347 = vld [vmem:[%s336 + $0x28] sm:$0xf]
    %v348 = vld [vmem:[%s336 + $0x2c] sm:$0xf]
    %v349 = vld [vmem:[%s336 + $0x30] sm:$0xf]
    %v350 = vld [vmem:[%s336 + $0x34] sm:$0xf]
    %v351 = vld [vmem:[%s336 + $0x38] sm:$0xf]
    %v352 = vld [vmem:[%s336 + $0x3c] sm:$0xf]
    %v353 = vld [vmem:[%s336 + $0x40] sm:$0xf]
    %v354 = vld [vmem:[%s336 + $0x44] sm:$0xf]
    %v355 = vld [vmem:[%s336 + $0x48] sm:$0xf]
    %v356 = vld [vmem:[%s336 + $0x4c] sm:$0xf]
    %v357 = vld [vmem:[%s336 + $0x50] sm:$0xf]
    %v358 = vld [vmem:[%s336 + $0x54] sm:$0xf]
    %v359 = vld [vmem:[%s336 + $0x58] sm:$0xf]
    %v360 = vld [vmem:[%s336 + $0x5c] sm:$0xf]
    %v361 = vld [vmem:[%s336 + $0x60] sm:$0xf]
    %v362 = vld [vmem:[%s336 + $0x64] sm:$0xf]
    %v363 = vld [vmem:[%s336 + $0x68] sm:$0xf]
    %v364 = vld [vmem:[%s336 + $0x6c] sm:$0xf]
    %v365 = vld [vmem:[%s336 + $0x70] sm:$0xf]
    %v366 = vld [vmem:[%s336 + $0x74] sm:$0xf]
    %v367 = vld [vmem:[%s336 + $0x78] sm:$0xf]
    %v368 = vld [vmem:[%s336 + $0x7c] sm:$0xf]
    %v401 = vunpack.c.l.b16 %v337
    %v402 = vunpack.c.l.b16 %v338
    %v403 = vunpack.c.l.b16 %v339
    %v404 = vunpack.c.l.b16 %v340
    %v405 = vunpack.c.l.b16 %v341
    %v406 = vunpack.c.l.b16 %v342
    %v407 = vunpack.c.l.b16 %v343
    %v408 = vunpack.c.l.b16 %v344
    %v409 = vunpack.c.l.b16 %v345
    %v410 = vunpack.c.l.b16 %v346
    %v411 = vunpack.c.l.b16 %v347
    %v412 = vunpack.c.l.b16 %v348
    %v413 = vunpack.c.l.b16 %v349
    %v414 = vunpack.c.l.b16 %v350
    %v415 = vunpack.c.l.b16 %v351
    %v416 = vunpack.c.l.b16 %v352
    %v417 = vunpack.c.l.b16 %v353
    %v418 = vunpack.c.l.b16 %v354
    %v419 = vunpack.c.l.b16 %v355
    %v420 = vunpack.c.l.b16 %v356
    %v421 = vunpack.c.l.b16 %v357
    %v422 = vunpack.c.l.b16 %v358
    %v423 = vunpack.c.l.b16 %v359
    %v424 = vunpack.c.l.b16 %v360
    %v425 = vunpack.c.l.b16 %v361
    %v426 = vunpack.c.l.b16 %v362
    %v427 = vunpack.c.l.b16 %v363
    %v428 = vunpack.c.l.b16 %v364
    %v429 = vunpack.c.l.b16 %v365
    %v430 = vunpack.c.l.b16 %v366
    %v431 = vunpack.c.l.b16 %v367
    %v432 = vunpack.c.l.b16 %v368
    %v433 = vpack.c.b16 %v402, %v401
    %v434 = vpack.c.b16 %v404, %v403
    %v435 = vpack.c.b16 %v406, %v405
    %v436 = vpack.c.b16 %v408, %v407
    %v437 = vpack.c.b16 %v410, %v409
    %v438 = vpack.c.b16 %v412, %v411
    %v439 = vpack.c.b16 %v414, %v413
    %v440 = vpack.c.b16 %v416, %v415
    %v441 = vpack.c.b16 %v418, %v417
    %v442 = vpack.c.b16 %v420, %v419
    %v443 = vpack.c.b16 %v422, %v421
    %v444 = vpack.c.b16 %v424, %v423
    %v445 = vpack.c.b16 %v426, %v425
    %v446 = vpack.c.b16 %v428, %v427
    %v447 = vpack.c.b16 %v430, %v429
    %v448 = vpack.c.b16 %v432, %v431
    %465 = vmatprep.subr.bf16.mxu0 0
    %466 = vmatpush1.bf16.msra.mxu0 %v433
    %467 = vmatprep.subr.bf16.mxu0 0
    %468 = vmatpush1.bf16.msra.mxu0 %v434
    %469 = vmatprep.subr.bf16.mxu0 0
    %470 = vmatpush1.bf16.msra.mxu0 %v435
    %471 = vmatprep.subr.bf16.mxu0 0
    %472 = vmatpush1.bf16.msra.mxu0 %v436
    %473 = vmatprep.subr.bf16.mxu0 0
    %474 = vmatpush1.bf16.msra.mxu0 %v437
    %475 = vmatprep.subr.bf16.mxu0 0
    %476 = vmatpush1.bf16.msra.mxu0 %v438
    %477 = vmatprep.subr.bf16.mxu0 0
    %478 = vmatpush1.bf16.msra.mxu0 %v439
    %479 = vmatprep.subr.bf16.mxu0 0
    %480 = vmatpush1.bf16.msra.mxu0 %v440
    %481 = vmatprep.subr.bf16.mxu0 0
    %482 = vmatpush1.bf16.msra.mxu0 %v441
    %483 = vmatprep.subr.bf16.mxu0 0
    %484 = vmatpush1.bf16.msra.mxu0 %v442
    %485 = vmatprep.subr.bf16.mxu0 0
    %486 = vmatpush1.bf16.msra.mxu0 %v443
    %487 = vmatprep.subr.bf16.mxu0 0
    %488 = vmatpush1.bf16.msra.mxu0 %v444
    %489 = vmatprep.subr.bf16.mxu0 0
    %490 = vmatpush1.bf16.msra.mxu0 %v445
    %491 = vmatprep.subr.bf16.mxu0 0
    %492 = vmatpush1.bf16.msra.mxu0 %v446
    %493 = vmatprep.subr.bf16.mxu0 0
    %494 = vmatpush1.bf16.msra.mxu0 %v447
    %495 = vmatprep.subr.bf16.mxu0 0
    %496 = vmatpush1.bf16.msra.mxu0 %v448
    %497 = vmatprep.mubr.bf16.mxu0 %v293
    %498 = vmatmul.mubr.bf16.gmra.mrb[0].mxu0 %v335
    %v499 = vpop.f32.mrb[0].mxu0
    %v500 = vadd.f32 0.0, %v499
    %v501 = vpop.f32.mrb[0].mxu0
    %v502 = vpop.f32.mrb[0].mxu0
    %v503 = vadd.f32 0.0, %v502
    %v504 = vpop.f32.mrb[0].mxu0
    %505 = vdwg.mxu0
    %v506 = vmax.f32 %v500, 0.0
    %v507 = vmax.f32 %v503, 0.0
    %v508 = vpack.c.bf16 %v507, %v506
    %509 = vst [vmem:[#allocation2] sm:$0xff] %v508
    %v510 = vld [vmem:[#allocation2] sm:$0xff]
    %511 = vmatprep.subr.bf16.mxu0 0
    %512 = vmatpush1.bf16.msra.mxu0 %v510
    %513 = vmatprep.subr.bf16.mxu0 0
    %514 = vmatpush1.bf16.msra.mxu0 0
    %515 = vmatprep.subr.bf16.mxu0 0
    %516 = vmatpush1.bf16.msra.mxu0 0
    %517 = vmatprep.subr.bf16.mxu0 0
    %518 = vmatpush1.bf16.msra.mxu0 0
    %519 = vmatprep.subr.bf16.mxu0 0
    %520 = vmatpush1.bf16.msra.mxu0 0
    %521 = vmatprep.subr.bf16.mxu0 0
    %522 = vmatpush1.bf16.msra.mxu0 0
    %523 = vmatprep.subr.bf16.mxu0 0
    %524 = vmatpush1.bf16.msra.mxu0 0
    %525 = vmatprep.subr.bf16.mxu0 0
    %526 = vmatpush1.bf16.msra.mxu0 0
    %527 = vmatprep.subr.bf16.mxu0 0
    %528 = vmatpush1.bf16.msra.mxu0 0
    %529 = vmatprep.subr.bf16.mxu0 0
    %530 = vmatpush1.bf16.msra.mxu0 0
    %531 = vmatprep.subr.bf16.mxu0 0
    %532 = vmatpush1.bf16.msra.mxu0 0
    %533 = vmatprep.subr.bf16.mxu0 0
    %534 = vmatpush1.bf16.msra.mxu0 0
    %535 = vmatprep.subr.bf16.mxu0 0
    %536 = vmatpush1.bf16.msra.mxu0 0
    %537 = vmatprep.subr.bf16.mxu0 0
    %538 = vmatpush1.bf16.msra.mxu0 0
    %539 = vmatprep.subr.bf16.mxu0 0
    %540 = vmatpush1.bf16.msra.mxu0 0
    %541 = vmatprep.subr.bf16.mxu0 0
    %542 = vmatpush1.bf16.msra.mxu0 0
    %543 = vmatprep.mubr.bf16.mxu0 0
    %544 = vmatmul.mubr.bf16.gmra.mrb[0].mxu0 %v76
    %v545 = vpop.f32.mrb[0].mxu0
    %v546 = vadd.f32 0.0, %v545
    %v547 = vpop.f32.mrb[0].mxu0
    %v548 = vpop.f32.mrb[0].mxu0
    %v549 = vadd.f32 0.0, %v548
    %v550 = vpop.f32.mrb[0].mxu0
    %551 = vdwg.mxu0
    %v552 = vpack.c.bf16 %v549, %v546
    %s553 = scalar_lea.vmem [#allocation8], 256
    %v554 = vld [vmem:[%s553] sm:$0xf]
    %v555 = vld [vmem:[%s553 + $0x4] sm:$0xf]
    %v556 = vld [vmem:[%s553 + $0x8] sm:$0xf]
    %v557 = vld [vmem:[%s553 + $0xc] sm:$0xf]
    %v558 = vld [vmem:[%s553 + $0x10] sm:$0xf]
    %v559 = vld [vmem:[%s553 + $0x14] sm:$0xf]
    %v560 = vld [vmem:[%s553 + $0x18] sm:$0xf]
    %v561 = vld [vmem:[%s553 + $0x1c] sm:$0xf]
    %v562 = vld [vmem:[%s553 + $0x20] sm:$0xf]
    %v563 = vld [vmem:[%s553 + $0x24] sm:$0xf]
    %v564 = vld [vmem:[%s553 + $0x28] sm:$0xf]
    %v565 = vld [vmem:[%s553 + $0x2c] sm:$0xf]
    %v566 = vld [vmem:[%s553 + $0x30] sm:$0xf]
    %v567 = vld [vmem:[%s553 + $0x34] sm:$0xf]
    %v568 = vld [vmem:[%s553 + $0x38] sm:$0xf]
    %v569 = vld [vmem:[%s553 + $0x3c] sm:$0xf]
    %v570 = vld [vmem:[%s553 + $0x40] sm:$0xf]
    %v571 = vld [vmem:[%s553 + $0x44] sm:$0xf]
    %v572 = vld [vmem:[%s553 + $0x48] sm:$0xf]
    %v573 = vld [vmem:[%s553 + $0x4c] sm:$0xf]
    %v574 = vld [vmem:[%s553 + $0x50] sm:$0xf]
    %v575 = vld [vmem:[%s553 + $0x54] sm:$0xf]
    %v576 = vld [vmem:[%s553 + $0x58] sm:$0xf]
    %v577 = vld [vmem:[%s553 + $0x5c] sm:$0xf]
    %v578 = vld [vmem:[%s553 + $0x60] sm:$0xf]
    %v579 = vld [vmem:[%s553 + $0x64] sm:$0xf]
    %v580 = vld [vmem:[%s553 + $0x68] sm:$0xf]
    %v581 = vld [vmem:[%s553 + $0x6c] sm:$0xf]
    %v582 = vld [vmem:[%s553 + $0x70] sm:$0xf]
    %v583 = vld [vmem:[%s553 + $0x74] sm:$0xf]
    %v584 = vld [vmem:[%s553 + $0x78] sm:$0xf]
    %v585 = vld [vmem:[%s553 + $0x7c] sm:$0xf]
    %v618 = vunpack.c.l.b16 %v554
    %v619 = vunpack.c.l.b16 %v555
    %v620 = vunpack.c.l.b16 %v556
    %v621 = vunpack.c.l.b16 %v557
    %v622 = vunpack.c.l.b16 %v558
    %v623 = vunpack.c.l.b16 %v559
    %v624 = vunpack.c.l.b16 %v560
    %v625 = vunpack.c.l.b16 %v561
    %v626 = vunpack.c.l.b16 %v562
    %v627 = vunpack.c.l.b16 %v563
    %v628 = vunpack.c.l.b16 %v564
    %v629 = vunpack.c.l.b16 %v565
    %v630 = vunpack.c.l.b16 %v566
    %v631 = vunpack.c.l.b16 %v567
    %v632 = vunpack.c.l.b16 %v568
    %v633 = vunpack.c.l.b16 %v569
    %v634 = vunpack.c.l.b16 %v570
    %v635 = vunpack.c.l.b16 %v571
    %v636 = vunpack.c.l.b16 %v572
    %v637 = vunpack.c.l.b16 %v573
    %v638 = vunpack.c.l.b16 %v574
    %v639 = vunpack.c.l.b16 %v575
    %v640 = vunpack.c.l.b16 %v576
    %v641 = vunpack.c.l.b16 %v577
    %v642 = vunpack.c.l.b16 %v578
    %v643 = vunpack.c.l.b16 %v579
    %v644 = vunpack.c.l.b16 %v580
    %v645 = vunpack.c.l.b16 %v581
    %v646 = vunpack.c.l.b16 %v582
    %v647 = vunpack.c.l.b16 %v583
    %v648 = vunpack.c.l.b16 %v584
    %v649 = vunpack.c.l.b16 %v585
    %v650 = vpack.c.b16 %v619, %v618
    %v651 = vpack.c.b16 %v621, %v620
    %v652 = vpack.c.b16 %v623, %v622
    %v653 = vpack.c.b16 %v625, %v624
    %v654 = vpack.c.b16 %v627, %v626
    %v655 = vpack.c.b16 %v629, %v628
    %v656 = vpack.c.b16 %v631, %v630
    %v657 = vpack.c.b16 %v633, %v632
    %v658 = vpack.c.b16 %v635, %v634
    %v659 = vpack.c.b16 %v637, %v636
    %v660 = vpack.c.b16 %v639, %v638
    %v661 = vpack.c.b16 %v641, %v640
    %v662 = vpack.c.b16 %v643, %v642
    %v663 = vpack.c.b16 %v645, %v644
    %v664 = vpack.c.b16 %v647, %v646
    %v665 = vpack.c.b16 %v649, %v648
    %682 = vmatprep.subr.bf16.mxu0 0
    %683 = vmatpush1.bf16.msra.mxu0 %v650
    %684 = vmatprep.subr.bf16.mxu0 0
    %685 = vmatpush1.bf16.msra.mxu0 %v651
    %686 = vmatprep.subr.bf16.mxu0 0
    %687 = vmatpush1.bf16.msra.mxu0 %v652
    %688 = vmatprep.subr.bf16.mxu0 0
    %689 = vmatpush1.bf16.msra.mxu0 %v653
    %690 = vmatprep.subr.bf16.mxu0 0
    %691 = vmatpush1.bf16.msra.mxu0 %v654
    %692 = vmatprep.subr.bf16.mxu0 0
    %693 = vmatpush1.bf16.msra.mxu0 %v655
    %694 = vmatprep.subr.bf16.mxu0 0
    %695 = vmatpush1.bf16.msra.mxu0 %v656
    %696 = vmatprep.subr.bf16.mxu0 0
    %697 = vmatpush1.bf16.msra.mxu0 %v657
    %698 = vmatprep.subr.bf16.mxu0 0
    %699 = vmatpush1.bf16.msra.mxu0 %v658
    %700 = vmatprep.subr.bf16.mxu0 0
    %701 = vmatpush1.bf16.msra.mxu0 %v659
    %702 = vmatprep.subr.bf16.mxu0 0
    %703 = vmatpush1.bf16.msra.mxu0 %v660
    %704 = vmatprep.subr.bf16.mxu0 0
    %705 = vmatpush1.bf16.msra.mxu0 %v661
    %706 = vmatprep.subr.bf16.mxu0 0
    %707 = vmatpush1.bf16.msra.mxu0 %v662
    %708 = vmatprep.subr.bf16.mxu0 0
    %709 = vmatpush1.bf16.msra.mxu0 %v663
    %710 = vmatprep.subr.bf16.mxu0 0
    %711 = vmatpush1.bf16.msra.mxu0 %v664
    %712 = vmatprep.subr.bf16.mxu0 0
    %713 = vmatpush1.bf16.msra.mxu0 %v665
    %714 = vmatprep.mubr.bf16.mxu0 %v510
    %715 = vmatmul.mubr.bf16.gmra.mrb[0].mxu0 %v552
    %v716 = vpop.f32.mrb[0].mxu0
    %v717 = vadd.f32 0.0, %v716
    %v718 = vpop.f32.mrb[0].mxu0
    %v719 = vpop.f32.mrb[0].mxu0
    %v720 = vadd.f32 0.0, %v719
    %v721 = vpop.f32.mrb[0].mxu0
    %722 = vdwg.mxu0
    %723 = vst [vmem:[#allocation9] sm:$0xff] %v717
    %724 = vst [vmem:[#allocation9 + $0x8] sm:$0xff] %v720
    // Predicated region
    $region26: #{tpu_custom_call.1} parent=1 // pred_check
      _
    $region27: #{tpu_custom_call.1} parent=1 // pred_check_branch
      %726 = sbr.rel (0) target = $region29
    $region28: #{tpu_custom_call.1} parent=1 // pred_region
      %s728 = ssub.s32 256, 256
      %729 = vsyncadd [#allocation5], %s728
      %s730 = sshll.u32 [#allocation9], 4
      %s731 = int_to_ptr.vmem [resolvable:$true] %s730
      %736 = dma.vmem_to_hbm [thread:$0]  %s731, 256, %s3, [#allocation5], 128, 128, 8
    $region29: #{tpu_custom_call.1} parent=1 // pred_fallthru
      _
    // Predicated region
    $region30: #{tpu_custom_call.1} parent=1 // pred_check
      _
    $region31: #{tpu_custom_call.1} parent=1 // pred_check_branch
      %738 = sbr.rel (0) target = $region33
    $region32: #{tpu_custom_call.1} parent=1 // pred_region
      %739 = dma.done [#allocation5], 256
    $region33: #{tpu_custom_call.1} parent=1 // pred_fallthru
      _
    %740 = vsyncpa [#allocation4], 1
    %741 = vsyncpa [#allocation7], 1
    %742 = vsyncpa [#allocation5], 1

</llo_original>
